<compile_context>
chip_gen: v5e
topology: v5e:2x2
jax: 0.10.0
libtpu: 0.0.40
codegen_flags: <defaults>
</compile_context>

<pallas_src>
import jax
import jax.numpy as jnp
from jax.experimental import pallas as pl
from jax.experimental.pallas import tpu as pltpu

T_SPIKE = 4.0   # MultiSpike_norm4 T (module default; MS_MLP passes T=None -> 4.0)
INV_T = 1.0 / T_SPIKE
BN_EPS = 1e-5


def _ms_mlp_kernel(x_ref, w1_ref, s1_ref, t1_ref, w2_ref, s2_ref, t2_ref, o_ref):
    # x_ref: (1, C_in, TN) block; channels on sublanes, spatial positions on lanes.
    x = x_ref[0]                                                     # (C_in, TN) f32

    # fc1_spike: round(clamp(x, 0, T)) / T  (jnp.round == round-half-to-even, as torch)
    xs = (jnp.round(jnp.clip(x, 0.0, T_SPIKE)) * INV_T).astype(w1_ref.dtype)

    # fc1_conv (1x1 conv) + fc1_bn (+ folded conv bias): dot on MXU, f32 accumulate.
    h = jnp.dot(w1_ref[...], xs, preferred_element_type=jnp.float32)  # (hidden, TN)
    h = h * s1_ref[...] + t1_ref[...]                                 # (hidden,1) bcast

    # fc2_spike
    hs = (jnp.round(jnp.clip(h, 0.0, T_SPIKE)) * INV_T).astype(w2_ref.dtype)

    # fc2_conv + fc2_bn (+ folded conv bias)
    y = jnp.dot(w2_ref[...], hs, preferred_element_type=jnp.float32)  # (C_out, TN)
    y = y * s2_ref[...] + t2_ref[...]

    o_ref[0] = y.astype(o_ref.dtype)


def _choose_tile_n(N, c_in, c_hidden, c_out,
                   max_tile=2048, vmem_budget_bytes=24 * 1024 * 1024):
    """Largest lane-aligned (multiple of 128) spatial tile that divides N and
    keeps the per-step footprint (double-buffered input+output slabs plus the
    f32 intermediates) inside a budget that also fits v7x's smaller VMEM."""
    if N % 128 != 0:
        # Full-extent last dim is always a legal block; realistic H*W are 128-multiples.
        return N
    bytes_per_col = 4 * (2 * c_in + 2 * c_out + 2 * c_hidden)
    cap = vmem_budget_bytes // max(bytes_per_col, 1)
    cap = max(128, (cap // 128) * 128)
    tn = min(N, max_tile, cap)
    tn = max(128, (tn // 128) * 128)
    while tn > 128 and N % tn != 0:
        tn -= 128
    return tn


def ms_mlp_forward(x_nchw, params, *, compute_dtype=jnp.bfloat16, out_dtype=None):
    """x_nchw: (B, C, H, W). Returns (B, C_out, H, W) (C_out == C by default)."""
    B, C, H, W = x_nchw.shape
    N = H * W
    hidden = params["w1"].shape[0]       # w1: (hidden, C)   (PyTorch Conv1d layout)
    C_out = params["w2"].shape[0]        # w2: (C_out, hidden)
    out_dtype = out_dtype or x_nchw.dtype

    # (B, C, H, W) -> (B, C, N): pure reshape, no transpose / HBM round-trip.
    x_bcn = x_nchw.reshape(B, C, N)

    # Fold BN (eval) + conv bias into a single per-channel scale/shift:
    #   bn((W x) + b) = (W x) * s + ((b - mean) * s + beta),  s = gamma / sqrt(var + eps)
    def fold(bias, gamma, beta, mean, var):
        s = gamma / jnp.sqrt(var + BN_EPS)
        t = (bias - mean) * s + beta
        return s.reshape(-1, 1).astype(jnp.float32), t.reshape(-1, 1).astype(jnp.float32)

    s1, t1 = fold(params["b1"], params["bn1_gamma"], params["bn1_beta"],
                  params["bn1_mean"], params["bn1_var"])
    s2, t2 = fold(params["b2"], params["bn2_gamma"], params["bn2_beta"],
                  params["bn2_mean"], params["bn2_var"])

    # MXU fast path: bf16 operands, f32 accumulation (activation cast is exact).
    w1 = params["w1"].astype(compute_dtype)      # (hidden, C)
    w2 = params["w2"].astype(compute_dtype)      # (C_out, hidden)

    tn = _choose_tile_n(N, C, hidden, C_out)
    grid = (B, N // tn)

    def const_spec(arr):
        # Full-array block, resident across the whole grid (index_map ignores b, n).
        return pl.BlockSpec(arr.shape, lambda b, n: (0,) * arr.ndim)

    out_bcn = pl.pallas_call(
        _ms_mlp_kernel,
        out_shape=jax.ShapeDtypeStruct((B, C_out, N), out_dtype),
        grid_spec=pltpu.PrefetchScalarGridSpec(
            num_scalar_prefetch=0,
            grid=grid,
            in_specs=[
                pl.BlockSpec((1, C, tn), lambda b, n: (b, 0, n)),     # x tile
                const_spec(w1),                                       # (hidden, C)
                const_spec(s1), const_spec(t1),                       # (hidden, 1)
                const_spec(w2),                                       # (C_out, hidden)
                const_spec(s2), const_spec(t2),                       # (C_out, 1)
            ],
            out_specs=pl.BlockSpec((1, C_out, tn), lambda b, n: (b, 0, n)),
        ),
        compiler_params=pltpu.CompilerParams(
            dimension_semantics=("parallel", "parallel"),
            vmem_limit_bytes=32 * 1024 * 1024,
        ),
    )(x_bcn, w1, s1, t1, w2, s2, t2)

    return out_bcn.reshape(B, C_out, H, W)


def make_params(key, in_features, hidden_features, out_features):
    ks = jax.random.split(key, 10)
    # Conv1d(k=1) weights in PyTorch are (C_out, C_in, 1); stored here as (C_out, C_in).
    w1 = jax.random.normal(ks[0], (hidden_features, in_features), jnp.float32) * 0.2
    b1 = jax.random.normal(ks[1], (hidden_features,), jnp.float32) * 0.1
    w2 = jax.random.normal(ks[2], (out_features, hidden_features), jnp.float32) * 0.2
    b2 = jax.random.normal(ks[3], (out_features,), jnp.float32) * 0.1
    return dict(
        w1=w1, b1=b1, w2=w2, b2=b2,
        bn1_gamma=1.0 + 0.1 * jax.random.normal(ks[4], (hidden_features,), jnp.float32),
        bn1_beta=0.1 * jax.random.normal(ks[5], (hidden_features,), jnp.float32),
        bn1_mean=0.05 * jax.random.normal(ks[6], (hidden_features,), jnp.float32),
        bn1_var=jnp.abs(1.0 + 0.1 * jax.random.normal(ks[7], (hidden_features,), jnp.float32)),
        bn2_gamma=1.0 + 0.1 * jax.random.normal(ks[8], (out_features,), jnp.float32),
        bn2_beta=0.1 * jax.random.normal(ks[9], (out_features,), jnp.float32),
        bn2_mean=jnp.zeros((out_features,), jnp.float32),
        bn2_var=jnp.ones((out_features,), jnp.float32),
    )


def ms_mlp_ref(x_nchw, params, weight_dtype=jnp.float32):
    """Pure-JAX reference mirroring the PyTorch eval forward, op by op.
    weight_dtype lets the reference share the kernel's deliberate bf16 weight
    precision (activations after spike quantization are exact in bf16)."""
    B, C, H, W = x_nchw.shape
    N = H * W
    w1 = params["w1"].astype(weight_dtype).astype(jnp.float32)     # (hidden, C)
    w2 = params["w2"].astype(weight_dtype).astype(jnp.float32)     # (C_out, hidden)

    x = x_nchw.reshape(B, C, N)
    x = jnp.round(jnp.clip(x, 0.0, T_SPIKE)) / T_SPIKE
    h = jnp.einsum("hc,bcn->bhn", w1, x) + params["b1"][None, :, None]
    s1 = params["bn1_gamma"] / jnp.sqrt(params["bn1_var"] + BN_EPS)
    h = (h - params["bn1_mean"][None, :, None]) * s1[None, :, None] \
        + params["bn1_beta"][None, :, None]
    h = jnp.round(jnp.clip(h, 0.0, T_SPIKE)) / T_SPIKE
    y = jnp.einsum("ch,bhn->bcn", w2, h) + params["b2"][None, :, None]
    s2 = params["bn2_gamma"] / jnp.sqrt(params["bn2_var"] + BN_EPS)
    y = (y - params["bn2_mean"][None, :, None]) * s2[None, :, None] \
        + params["bn2_beta"][None, :, None]
    C_out = w2.shape[0]
    return y.reshape(B, C_out, H, W)


if __name__ == "__main__":
    key = jax.random.PRNGKey(0)
    kx, kp = jax.random.split(key)

    B, C, H, W = 2, 4, 16, 16
    hidden = 32
    x = 4.0 * jax.random.uniform(kx, (B, C, H, W), jnp.float32) - 1.0

    params = make_params(kp, in_features=C, hidden_features=hidden, out_features=C)

    out = ms_mlp_forward(x, params)          # bf16 MXU operands, f32 accumulate
    out = jax.block_until_ready(out)
    assert out.shape == (B, C, H, W)

    # Compare against the reference at the same (documented) weight precision.
    ref = ms_mlp_ref(x, params, weight_dtype=jnp.bfloat16)
    max_err = float(jnp.max(jnp.abs(out.astype(jnp.float32) - ref)))
    assert jnp.allclose(out.astype(jnp.float32), ref, atol=5e-3, rtol=5e-3), max_err

    print("KERNEL_OK")
</pallas_src>

<mosaic_0001>
module attributes {stable_mosaic.version = 11 : i64} {
  func.func @_ms_mlp_kernel(%arg0: i32, %arg1: i32, %arg2: memref<1x4x256xf32, #tpu.memory_space<vmem>>, %arg3: memref<32x4xbf16, #tpu.memory_space<vmem>>, %arg4: memref<32x1xf32, #tpu.memory_space<vmem>>, %arg5: memref<32x1xf32, #tpu.memory_space<vmem>>, %arg6: memref<4x32xbf16, #tpu.memory_space<vmem>>, %arg7: memref<4x1xf32, #tpu.memory_space<vmem>>, %arg8: memref<4x1xf32, #tpu.memory_space<vmem>>, %arg9: memref<1x4x256xf32, #tpu.memory_space<vmem>>) attributes {dimension_semantics = [#tpu.dimension_semantics<parallel>, #tpu.dimension_semantics<parallel>], iteration_bounds = array<i64: 2, 1>, scalar_prefetch = 0 : i64, scratch_operands = 0 : i64, tpu.core_type = #tpu.core_type<tc>, window_params = [{transform_indices = @transform_0, window_bounds = array<i64: 1, 4, 256>}, {pipeline_mode = #tpu.pipeline_mode<synchronous>, transform_indices = @transform_1, window_bounds = array<i64: 32, 4>}, {pipeline_mode = #tpu.pipeline_mode<synchronous>, transform_indices = @transform_2, window_bounds = array<i64: 32, 1>}, {pipeline_mode = #tpu.pipeline_mode<synchronous>, transform_indices = @transform_3, window_bounds = array<i64: 32, 1>}, {pipeline_mode = #tpu.pipeline_mode<synchronous>, transform_indices = @transform_4, window_bounds = array<i64: 4, 32>}, {pipeline_mode = #tpu.pipeline_mode<synchronous>, transform_indices = @transform_5, window_bounds = array<i64: 4, 1>}, {pipeline_mode = #tpu.pipeline_mode<synchronous>, transform_indices = @transform_6, window_bounds = array<i64: 4, 1>}, {transform_indices = @transform_7, window_bounds = array<i64: 1, 4, 256>}]} {
    %c0 = arith.constant 0 : index
    %c0_0 = arith.constant 0 : index
    %c0_1 = arith.constant 0 : index
    %0 = vector.load %arg2[%c0, %c0_0, %c0_1] : memref<1x4x256xf32, #tpu.memory_space<vmem>>, vector<1x4x256xf32>
    %1 = vector.shape_cast %0 : vector<1x4x256xf32> to vector<4x256xf32>
    %cst = arith.constant 0.000000e+00 : f32
    %cst_2 = arith.constant 4.000000e+00 : f32
    %2 = vector.broadcast %cst : f32 to vector<4x256xf32>
    %3 = arith.maximumf %2, %1 : vector<4x256xf32>
    %4 = vector.broadcast %cst_2 : f32 to vector<4x256xf32>
    %5 = arith.minimumf %4, %3 : vector<4x256xf32>
    %6 = math.roundeven %5 : vector<4x256xf32>
    %cst_3 = arith.constant 2.500000e-01 : f32
    %7 = vector.broadcast %cst_3 : f32 to vector<4x256xf32>
    %8 = arith.mulf %6, %7 : vector<4x256xf32>
    %9 = arith.truncf %8 : vector<4x256xf32> to vector<4x256xbf16>
    %c0_4 = arith.constant 0 : index
    %c0_5 = arith.constant 0 : index
    %10 = vector.load %arg3[%c0_4, %c0_5] : memref<32x4xbf16, #tpu.memory_space<vmem>>, vector<32x4xbf16>
    %cst_6 = arith.constant dense<0.000000e+00> : vector<32x256xf32>
    %11 = tpu.matmul %10, %9, %cst_6 {dimension_numbers = #tpu.dot_dimension_numbers<[1], [0], [0], [1], [0, 0, 1, 1], [], []>} : vector<32x4xbf16>, vector<4x256xbf16>, vector<32x256xf32> -> vector<32x256xf32>
    %c0_7 = arith.constant 0 : index
    %c0_8 = arith.constant 0 : index
    %12 = vector.load %arg4[%c0_7, %c0_8] : memref<32x1xf32, #tpu.memory_space<vmem>>, vector<32x1xf32>
    %13 = vector.broadcast %12 : vector<32x1xf32> to vector<32x256xf32>
    %14 = arith.mulf %11, %13 : vector<32x256xf32>
    %c0_9 = arith.constant 0 : index
    %c0_10 = arith.constant 0 : index
    %15 = vector.load %arg5[%c0_9, %c0_10] : memref<32x1xf32, #tpu.memory_space<vmem>>, vector<32x1xf32>
    %16 = vector.broadcast %15 : vector<32x1xf32> to vector<32x256xf32>
    %17 = arith.addf %14, %16 : vector<32x256xf32>
    %cst_11 = arith.constant 0.000000e+00 : f32
    %cst_12 = arith.constant 4.000000e+00 : f32
    %18 = vector.broadcast %cst_11 : f32 to vector<32x256xf32>
    %19 = arith.maximumf %18, %17 : vector<32x256xf32>
    %20 = vector.broadcast %cst_12 : f32 to vector<32x256xf32>
    %21 = arith.minimumf %20, %19 : vector<32x256xf32>
    %22 = math.roundeven %21 : vector<32x256xf32>
    %cst_13 = arith.constant 2.500000e-01 : f32
    %23 = vector.broadcast %cst_13 : f32 to vector<32x256xf32>
    %24 = arith.mulf %22, %23 : vector<32x256xf32>
    %25 = arith.truncf %24 : vector<32x256xf32> to vector<32x256xbf16>
    %c0_14 = arith.constant 0 : index
    %c0_15 = arith.constant 0 : index
    %26 = vector.load %arg6[%c0_14, %c0_15] : memref<4x32xbf16, #tpu.memory_space<vmem>>, vector<4x32xbf16>
    %cst_16 = arith.constant dense<0.000000e+00> : vector<4x256xf32>
    %27 = tpu.matmul %26, %25, %cst_16 {dimension_numbers = #tpu.dot_dimension_numbers<[1], [0], [0], [1], [0, 0, 1, 1], [], []>} : vector<4x32xbf16>, vector<32x256xbf16>, vector<4x256xf32> -> vector<4x256xf32>
    %c0_17 = arith.constant 0 : index
    %c0_18 = arith.constant 0 : index
    %28 = vector.load %arg7[%c0_17, %c0_18] : memref<4x1xf32, #tpu.memory_space<vmem>>, vector<4x1xf32>
    %29 = vector.broadcast %28 : vector<4x1xf32> to vector<4x256xf32>
    %30 = arith.mulf %27, %29 : vector<4x256xf32>
    %c0_19 = arith.constant 0 : index
    %c0_20 = arith.constant 0 : index
    %31 = vector.load %arg8[%c0_19, %c0_20] : memref<4x1xf32, #tpu.memory_space<vmem>>, vector<4x1xf32>
    %32 = vector.broadcast %31 : vector<4x1xf32> to vector<4x256xf32>
    %33 = arith.addf %30, %32 : vector<4x256xf32>
    %c0_21 = arith.constant 0 : index
    %c0_22 = arith.constant 0 : index
    %c0_23 = arith.constant 0 : index
    %34 = vector.load %arg9[%c0_21, %c0_22, %c0_23] : memref<1x4x256xf32, #tpu.memory_space<vmem>>, vector<1x4x256xf32>
    %35 = vector.shape_cast %34 : vector<1x4x256xf32> to vector<4x256xf32>
    %36 = vector.shape_cast %33 : vector<4x256xf32> to vector<1x4x256xf32>
    tpu.vector_store %arg9[%c0_21, %c0_22, %c0_23], %36 {strides = array<i32>} : memref<1x4x256xf32, #tpu.memory_space<vmem>>, vector<1x4x256xf32>,
    return
  }
  func.func @transform_0(%arg0: i32, %arg1: i32) -> (i32, i32, i32) {
    %c0_i32 = arith.constant 0 : i32
    %c0_i32_0 = arith.constant 0 : i32
    return %arg0, %c0_i32, %arg1 : i32, i32, i32
  }
  func.func @transform_1(%arg0: i32, %arg1: i32) -> (i32, i32) {
    %c0_i32 = arith.constant 0 : i32
    %c0_i32_0 = arith.constant 0 : i32
    %c0_i32_1 = arith.constant 0 : i32
    return %c0_i32, %c0_i32_0 : i32, i32
  }
  func.func @transform_2(%arg0: i32, %arg1: i32) -> (i32, i32) {
    %c0_i32 = arith.constant 0 : i32
    %c0_i32_0 = arith.constant 0 : i32
    %c0_i32_1 = arith.constant 0 : i32
    return %c0_i32, %c0_i32_0 : i32, i32
  }
  func.func @transform_3(%arg0: i32, %arg1: i32) -> (i32, i32) {
    %c0_i32 = arith.constant 0 : i32
    %c0_i32_0 = arith.constant 0 : i32
    %c0_i32_1 = arith.constant 0 : i32
    return %c0_i32, %c0_i32_0 : i32, i32
  }
  func.func @transform_4(%arg0: i32, %arg1: i32) -> (i32, i32) {
    %c0_i32 = arith.constant 0 : i32
    %c0_i32_0 = arith.constant 0 : i32
    %c0_i32_1 = arith.constant 0 : i32
    return %c0_i32, %c0_i32_0 : i32, i32
  }
  func.func @transform_5(%arg0: i32, %arg1: i32) -> (i32, i32) {
    %c0_i32 = arith.constant 0 : i32
    %c0_i32_0 = arith.constant 0 : i32
    %c0_i32_1 = arith.constant 0 : i32
    return %c0_i32, %c0_i32_0 : i32, i32
  }
  func.func @transform_6(%arg0: i32, %arg1: i32) -> (i32, i32) {
    %c0_i32 = arith.constant 0 : i32
    %c0_i32_0 = arith.constant 0 : i32
    %c0_i32_1 = arith.constant 0 : i32
    return %c0_i32, %c0_i32_0 : i32, i32
  }
  func.func @transform_7(%arg0: i32, %arg1: i32) -> (i32, i32, i32) {
    %c0_i32 = arith.constant 0 : i32
    %c0_i32_0 = arith.constant 0 : i32
    return %arg0, %c0_i32, %arg1 : i32, i32, i32
  }
}

</mosaic_0001>

<llo_original>
// kernel: tpu_custom_call.1
$region0: #{tpu_custom_call.1}
  #allocation0 [shape = 'u32[]', space=smem, size = 0x4, offset = 0x4, fixed_abs, tag = 'smem constant byte address 0x4 - core index']
  #allocation1 [shape = 'u32[72,128]{1,0:T(1,128)}', space=vmem, size = 0x9000, scoped, tag = 'internal scratch']
  %s0 = inlined_call_operand.vmem [shape: f32[2,4,256], index: 0, kind: input, shape index: {}]
  %s1 = inlined_call_operand.vmem [shape: bf16[32,4], index: 1, kind: input, shape index: {}]
  %s2 = inlined_call_operand.vmem [shape: f32[32,1], index: 2, kind: input, shape index: {}]
  %s3 = inlined_call_operand.vmem [shape: f32[32,1], index: 3, kind: input, shape index: {}]
  %s4 = inlined_call_operand.vmem [shape: bf16[4,32], index: 4, kind: input, shape index: {}]
  %s5 = inlined_call_operand.vmem [shape: f32[4,1], index: 5, kind: input, shape index: {}]
  %s6 = inlined_call_operand.vmem [shape: f32[4,1], index: 6, kind: input, shape index: {}]
  %s7 = inlined_call_operand.hbm [shape: f32[2,4,256], index: 7, kind: output, shape index: {}]
  %s8 = sld [smem:[#allocation0]]
  $region61: #{tpu_custom_call.1} parent=0
    _
  %s10 = ssub.s32 1, %s8
  %s11 = scalar_select 0, %s10, %s8
  $region1: #{tpu_custom_call.1} parent=0
    #allocation2 [shape = 'u8[8192]{0}', space=vmem, size = 0x2000, scoped, tag = 'output window, operand 0']
    #allocation3 [shape = 's32[2]{0}', space=sflag, size = 0x8, scoped, tag = 'scoped memory for tpu_custom_call.1']
    %12 = vsyncpa [#allocation3], 0
    %s13 = scalar_lea.sflag [#allocation3], 1
    %14 = vsyncpa %s13, 0
    loop: start=0, step=1, limit=4
    $region2: #{tpu_custom_call.1} parent=1 // loop_pre_header
      _
    $region3: #{tpu_custom_call.1} parent=1 // loop_header
      %s16 = sphi 0, %s20
      %p17 = scmp.ge.s32.totalorder %s16, 4
      %s23 = sphi 0, %s35
      %s24 = sphi 0, %s31
      %s25 = sphi 0, %s23
      %s26 = sphi 0, %s24
      %s27 = sphi 0, %s25
      %s28 = sphi 0, %s26
      %s40 = sphi 0, %s42
      %s43 = sphi 0, %s40
      %s44 = sphi 0, %s43
      %s60 = sphi 0, %s44
      %s64 = sphi 0, %s64
      %s66 = sphi 0, %s64
      %s67 = sphi 0, %s66
      %s81 = sphi 0, %s67
      %s85 = sphi 0, %s85
      %s87 = sphi 0, %s85
      %s88 = sphi 0, %s87
      %s102 = sphi 0, %s88
      %s106 = sphi 0, %s106
      %s108 = sphi 0, %s106
      %s109 = sphi 0, %s108
      %s123 = sphi 0, %s109
      %s127 = sphi 0, %s127
      %s129 = sphi 0, %s127
      %s130 = sphi 0, %s129
      %s144 = sphi 0, %s130
      %s148 = sphi 0, %s148
      %s150 = sphi 0, %s148
      %s151 = sphi 0, %s150
      %s165 = sphi 0, %s151
      %s169 = sphi 0, %s169
      %s171 = sphi 0, %s169
      %s172 = sphi 0, %s171
      %s186 = sphi 0, %s172
      %s194 = sphi 0, %s196
      %s197 = sphi 0, %s194
      %s198 = sphi 0, %s197
      %s214 = sphi 0, %s198
    $region4: #{tpu_custom_call.1} parent=1 // loop_header_branch
      %19 = sbr.rel (%p17) target = $region8
    $region5: #{tpu_custom_call.1} parent=1 // loop_body
      %s21 = ssub.s32 %s16, 1
      %s22 = ssub.s32 %s16, 2
      %s29 = sadd.s32 1, %s24
      %p30 = scmp.ge.s32.totalorder %s29, 1
      %s31 = scalar_select %p30, 0, %s29
      %s32 = sadd.s32 1, %s23
      %s33 = scalar_select %p30, %s32, %s23
      %p34 = scmp.ge.s32.totalorder %s33, 2
      %s35 = scalar_select %p34, 0, %s33
      %s36 = ssub.s32 %s23, %s35
      %s37 = ssub.s32 %s24, %s31
      %s38 = sor.u32 %s36, %s37
      %p39 = scmp.eq.s32.totalorder %s38, 0
      %s41 = sadd.s32 %s40, 1
      %s42 = scalar_select %p39, %s40, %s41
      %p45 = pneg %p39
      %p46 = scmp.eq.s32.totalorder %s16, 1
      %p47 = por %p45, %p46
      %p48 = scmp.ne.s32.totalorder %s40, %s43
      %p49 = scmp.eq.s32.totalorder %s16, 0
      %p50 = por %p48, %p49
      %p51 = scmp.ne.s32.totalorder %s40, %s43
      %p52 = scmp.eq.s32.totalorder %s21, 1
      %p53 = por %p51, %p52
      %p54 = scmp.ne.s32.totalorder %s43, %s44
      %p55 = scmp.eq.s32.totalorder %s21, 0
      %p56 = por %p54, %p55
      %p57 = scmp.ne.s32.totalorder %s43, %s44
      %p58 = scmp.eq.s32.totalorder %s22, 1
      %p59 = por %p57, %p58
      %p61 = scmp.ne.s32.totalorder %s44, %s60
      %p62 = scmp.eq.s32.totalorder %s22, 0
      %p63 = por %p61, %p62
      %s65 = sadd.s32 %s64, 1
      %p68 = scmp.eq.s32.totalorder %s16, 1
      %p69 = scmp.ne.s32.totalorder %s64, %s66
      %p70 = scmp.eq.s32.totalorder %s16, 0
      %p71 = por %p69, %p70
      %p72 = scmp.ne.s32.totalorder %s64, %s66
      %p73 = scmp.eq.s32.totalorder %s21, 1
      %p74 = por %p72, %p73
      %p75 = scmp.ne.s32.totalorder %s66, %s67
      %p76 = scmp.eq.s32.totalorder %s21, 0
      %p77 = por %p75, %p76
      %p78 = scmp.ne.s32.totalorder %s66, %s67
      %p79 = scmp.eq.s32.totalorder %s22, 1
      %p80 = por %p78, %p79
      %p82 = scmp.ne.s32.totalorder %s67, %s81
      %p83 = scmp.eq.s32.totalorder %s22, 0
      %p84 = por %p82, %p83
      %s86 = sadd.s32 %s85, 1
      %p89 = scmp.eq.s32.totalorder %s16, 1
      %p90 = scmp.ne.s32.totalorder %s85, %s87
      %p91 = scmp.eq.s32.totalorder %s16, 0
      %p92 = por %p90, %p91
      %p93 = scmp.ne.s32.totalorder %s85, %s87
      %p94 = scmp.eq.s32.totalorder %s21, 1
      %p95 = por %p93, %p94
      %p96 = scmp.ne.s32.totalorder %s87, %s88
      %p97 = scmp.eq.s32.totalorder %s21, 0
      %p98 = por %p96, %p97
      %p99 = scmp.ne.s32.totalorder %s87, %s88
      %p100 = scmp.eq.s32.totalorder %s22, 1
      %p101 = por %p99, %p100
      %p103 = scmp.ne.s32.totalorder %s88, %s102
      %p104 = scmp.eq.s32.totalorder %s22, 0
      %p105 = por %p103, %p104
      %s107 = sadd.s32 %s106, 1
      %p110 = scmp.eq.s32.totalorder %s16, 1
      %p111 = scmp.ne.s32.totalorder %s106, %s108
      %p112 = scmp.eq.s32.totalorder %s16, 0
      %p113 = por %p111, %p112
      %p114 = scmp.ne.s32.totalorder %s106, %s108
      %p115 = scmp.eq.s32.totalorder %s21, 1
      %p116 = por %p114, %p115
      %p117 = scmp.ne.s32.totalorder %s108, %s109
      %p118 = scmp.eq.s32.totalorder %s21, 0
      %p119 = por %p117, %p118
      %p120 = scmp.ne.s32.totalorder %s108, %s109
      %p121 = scmp.eq.s32.totalorder %s22, 1
      %p122 = por %p120, %p121
      %p124 = scmp.ne.s32.totalorder %s109, %s123
      %p125 = scmp.eq.s32.totalorder %s22, 0
      %p126 = por %p124, %p125
      %s128 = sadd.s32 %s127, 1
      %p131 = scmp.eq.s32.totalorder %s16, 1
      %p132 = scmp.ne.s32.totalorder %s127, %s129
      %p133 = scmp.eq.s32.totalorder %s16, 0
      %p134 = por %p132, %p133
      %p135 = scmp.ne.s32.totalorder %s127, %s129
      %p136 = scmp.eq.s32.totalorder %s21, 1
      %p137 = por %p135, %p136
      %p138 = scmp.ne.s32.totalorder %s129, %s130
      %p139 = scmp.eq.s32.totalorder %s21, 0
      %p140 = por %p138, %p139
      %p141 = scmp.ne.s32.totalorder %s129, %s130
      %p142 = scmp.eq.s32.totalorder %s22, 1
      %p143 = por %p141, %p142
      %p145 = scmp.ne.s32.totalorder %s130, %s144
      %p146 = scmp.eq.s32.totalorder %s22, 0
      %p147 = por %p145, %p146
      %s149 = sadd.s32 %s148, 1
      %p152 = scmp.eq.s32.totalorder %s16, 1
      %p153 = scmp.ne.s32.totalorder %s148, %s150
      %p154 = scmp.eq.s32.totalorder %s16, 0
      %p155 = por %p153, %p154
      %p156 = scmp.ne.s32.totalorder %s148, %s150
      %p157 = scmp.eq.s32.totalorder %s21, 1
      %p158 = por %p156, %p157
      %p159 = scmp.ne.s32.totalorder %s150, %s151
      %p160 = scmp.eq.s32.totalorder %s21, 0
      %p161 = por %p159, %p160
      %p162 = scmp.ne.s32.totalorder %s150, %s151
      %p163 = scmp.eq.s32.totalorder %s22, 1
      %p164 = por %p162, %p163
      %p166 = scmp.ne.s32.totalorder %s151, %s165
      %p167 = scmp.eq.s32.totalorder %s22, 0
      %p168 = por %p166, %p167
      %s170 = sadd.s32 %s169, 1
      %p173 = scmp.eq.s32.totalorder %s16, 1
      %p174 = scmp.ne.s32.totalorder %s169, %s171
      %p175 = scmp.eq.s32.totalorder %s16, 0
      %p176 = por %p174, %p175
      %p177 = scmp.ne.s32.totalorder %s169, %s171
      %p178 = scmp.eq.s32.totalorder %s21, 1
      %p179 = por %p177, %p178
      %p180 = scmp.ne.s32.totalorder %s171, %s172
      %p181 = scmp.eq.s32.totalorder %s21, 0
      %p182 = por %p180, %p181
      %p183 = scmp.ne.s32.totalorder %s171, %s172
      %p184 = scmp.eq.s32.totalorder %s22, 1
      %p185 = por %p183, %p184
      %p187 = scmp.ne.s32.totalorder %s172, %s186
      %p188 = scmp.eq.s32.totalorder %s22, 0
      %p189 = por %p187, %p188
      %s190 = ssub.s32 %s23, %s35
      %s191 = ssub.s32 %s24, %s31
      %s192 = sor.u32 %s190, %s191
      %p193 = scmp.eq.s32.totalorder %s192, 0
      %s195 = sadd.s32 %s194, 1
      %s196 = scalar_select %p193, %s194, %s195
      %p199 = pneg %p193
      %p200 = scmp.eq.s32.totalorder %s16, 1
      %p201 = por %p199, %p200
      %p202 = scmp.ne.s32.totalorder %s194, %s197
      %p203 = scmp.eq.s32.totalorder %s16, 0
      %p204 = por %p202, %p203
      %p205 = scmp.ne.s32.totalorder %s194, %s197
      %p206 = scmp.eq.s32.totalorder %s21, 1
      %p207 = por %p205, %p206
      %p208 = scmp.ne.s32.totalorder %s197, %s198
      %p209 = scmp.eq.s32.totalorder %s21, 0
      %p210 = por %p208, %p209
      %p211 = scmp.ne.s32.totalorder %s197, %s198
      %p212 = scmp.eq.s32.totalorder %s22, 1
      %p213 = por %p211, %p212
      %p215 = scmp.ne.s32.totalorder %s198, %s214
      %p216 = scmp.eq.s32.totalorder %s22, 0
      %p217 = por %p215, %p216
      %p218 = scmp.le.s32.totalorder 1, %s16
      %p219 = scmp.lt.s32.totalorder %s16, 3
      %p220 = pnand %p218, %p219
      %p221 = pneg %p220
      // Predicated region
      $region9: #{tpu_custom_call.1} parent=5 // pred_check
        _
      $region10: #{tpu_custom_call.1} parent=5 // pred_check_branch
        %223 = sbr.rel (%p220) target = $region12
      $region11: #{tpu_custom_call.1} parent=5 // pred_region
        %s224 = ssub.s32 %s16, 1
        // Predicated region
        $region13: #{tpu_custom_call.1} parent=11 // pred_check
          %p225 = pneg %p77
        $region14: #{tpu_custom_call.1} parent=11 // pred_check_branch
          %227 = sbr.rel (%p225) target = $region16
        $region15: #{tpu_custom_call.1} parent=11 // pred_region
          _
        $region16: #{tpu_custom_call.1} parent=11 // pred_fallthru
          _
        // Predicated region
        $region17: #{tpu_custom_call.1} parent=11 // pred_check
          %p228 = pneg %p98
        $region18: #{tpu_custom_call.1} parent=11 // pred_check_branch
          %230 = sbr.rel (%p228) target = $region20
        $region19: #{tpu_custom_call.1} parent=11 // pred_region
          _
        $region20: #{tpu_custom_call.1} parent=11 // pred_fallthru
          _
        // Predicated region
        $region21: #{tpu_custom_call.1} parent=11 // pred_check
          %p231 = pneg %p119
        $region22: #{tpu_custom_call.1} parent=11 // pred_check_branch
          %233 = sbr.rel (%p231) target = $region24
        $region23: #{tpu_custom_call.1} parent=11 // pred_region
          _
        $region24: #{tpu_custom_call.1} parent=11 // pred_fallthru
          _
        // Predicated region
        $region25: #{tpu_custom_call.1} parent=11 // pred_check
          %p234 = pneg %p140
        $region26: #{tpu_custom_call.1} parent=11 // pred_check_branch
          %236 = sbr.rel (%p234) target = $region28
        $region27: #{tpu_custom_call.1} parent=11 // pred_region
          _
        $region28: #{tpu_custom_call.1} parent=11 // pred_fallthru
          _
        // Predicated region
        $region29: #{tpu_custom_call.1} parent=11 // pred_check
          %p237 = pneg %p161
        $region30: #{tpu_custom_call.1} parent=11 // pred_check_branch
          %239 = sbr.rel (%p237) target = $region32
        $region31: #{tpu_custom_call.1} parent=11 // pred_region
          _
        $region32: #{tpu_custom_call.1} parent=11 // pred_fallthru
          _
        // Predicated region
        $region33: #{tpu_custom_call.1} parent=11 // pred_check
          %p240 = pneg %p182
        $region34: #{tpu_custom_call.1} parent=11 // pred_check_branch
          %242 = sbr.rel (%p240) target = $region36
        $region35: #{tpu_custom_call.1} parent=11 // pred_region
          _
        $region36: #{tpu_custom_call.1} parent=11 // pred_fallthru
          _
      $region12: #{tpu_custom_call.1} parent=5 // pred_fallthru
        _
      %p243 = scmp.lt.s32.totalorder %s16, 2
      // Predicated region
      $region37: #{tpu_custom_call.1} parent=5 // pred_check
        %p244 = pneg %p243
      $region38: #{tpu_custom_call.1} parent=5 // pred_check_branch
        %246 = sbr.rel (%p244) target = $region40
      $region39: #{tpu_custom_call.1} parent=5 // pred_region
        // Predicated region
        $region41: #{tpu_custom_call.1} parent=39 // pred_check
          %p247 = pneg %p50
        $region42: #{tpu_custom_call.1} parent=39 // pred_check_branch
          %249 = sbr.rel (%p247) target = $region44
        $region43: #{tpu_custom_call.1} parent=39 // pred_region
          %s250 = smul.u32 2, %s24
          %p251 = scmp.lt.s32.totalorder %s23, 1
          %s252 = scalar_select %p251, %s23, 1
          %p253 = scmp.lt.s32.totalorder %s250, 1
          %s254 = scalar_select %p253, %s250, 1
          %s255 = smul.addr %s252, 2
          %s256 = sadd.s32 %s254, %s255
          %s257 = smul.addr %s256, 4
          %s258 = scalar_lea.vmem %s0, %s257
          %s259 = smul.u32 2, %s24
        $region44: #{tpu_custom_call.1} parent=39 // pred_fallthru
          _
      $region40: #{tpu_custom_call.1} parent=5 // pred_fallthru
        _
      %p260 = scmp.le.s32.totalorder 1, %s16
      %p261 = scmp.lt.s32.totalorder %s16, 3
      %p262 = pnand %p260, %p261
      %p263 = pneg %p262
      // Predicated region
      $region45: #{tpu_custom_call.1} parent=5 // pred_check
        _
      $region46: #{tpu_custom_call.1} parent=5 // pred_check_branch
        %265 = sbr.rel (%p262) target = $region48
      $region47: #{tpu_custom_call.1} parent=5 // pred_region
        %s266 = ssub.s32 %s16, 1
        %s267 = smul.u32 2, %s26
        %p268 = scmp.lt.s32.totalorder %s25, 1
        %s269 = scalar_select %p268, %s25, 1
        %p270 = scmp.lt.s32.totalorder %s267, 1
        %s271 = scalar_select %p270, %s267, 1
        %s272 = smul.addr %s269, 2
        %s273 = sadd.s32 %s271, %s272
        %s274 = smul.addr %s273, 4
        %s275 = scalar_lea.vmem %s0, %s274
        %p276 = pneg %p56
        %p277 = pneg %p53
        %p278 = pneg %p77
        %p279 = pneg %p74
        %p280 = pneg %p98
        %p281 = pneg %p95
        %p282 = pneg %p119
        %p283 = pneg %p116
        %p284 = pneg %p140
        %p285 = pneg %p137
        %p286 = pneg %p161
        %p287 = pneg %p158
        %p288 = pneg %p182
        %p289 = pneg %p179
        %p290 = pneg %p210
        %p291 = pneg %p207
        %s292 = sand.u32 %s197, 1
        %s293 = scalar_lea.sflag [#allocation3], %s292
        %s294 = sand.u32 %s197, 1
        %s295 = smul.addr %s294, 8
        %s296 = scalar_lea.vmem [#allocation2], %s295
        %s297 = smul.u32 2, %s26
        %p298 = scmp.lt.s32.totalorder %s25, 1
        %s299 = scalar_select %p298, %s25, 1
        %p300 = scmp.lt.s32.totalorder %s297, 1
        %s301 = scalar_select %p300, %s297, 1
        %s302 = smul.addr %s299, 2
        %s303 = sadd.s32 %s301, %s302
        %s304 = smul.addr %s303, 4
        %s305 = scalar_lea.vmem %s0, %s304
        %s306 = smul.u32 2, %s26
        %s307 = smul.u32 2, %s26
        %v309 = vld [vmem:[%s305] sm:$0xff]
        %v310 = vmax.f32 %v309, 0.0
        %v311 = vmin.f32 %v310, 4.0
        %v312 = vround.ne.pseudo %v311
        %v313 = vmul.f32 %v312, 0.25
        %315 = vst [vmem:[#allocation1] ss:$2 sm:$0xff] %v313
        %v316 = vld.sshfl [vmem:[#allocation1] sm:$0xff pattern:$0x75316420]
        %v317 = vld.sshfl [vmem:[#allocation1 + $0x8] sm:$0xff pattern:$0x75316420]
        %v320 = vpack.c.bf16 %v316, %v316
        %v321 = vpack.c.bf16 %v317, %v317
        %v322 = vld [vmem:[%s1] sm:$0xf]
        %v323 = vld [vmem:[%s1 + $0x4] sm:$0xf]
        %v324 = vld [vmem:[%s1 + $0x8] sm:$0xf]
        %v325 = vld [vmem:[%s1 + $0xc] sm:$0xf]
        %v330 = vunpack.c.l.b16 %v322
        %v331 = vunpack.c.l.b16 %v323
        %v332 = vunpack.c.l.b16 %v324
        %v333 = vunpack.c.l.b16 %v325
        %v334 = vpack.c.b16 %v331, %v330
        %v335 = vpack.c.b16 %v333, %v332
        %vm336 = vcmask 31744
        %v338 = vsel %vm336, %v334, 0
        %v341 = vsel %vm336, %v335, 0
        %vm343 = vcmask 1041408
        %v345 = vsel %vm343, %v320, 0
        %v348 = vsel %vm343, %v321, 0
        %350 = vmatpush.bf16.msra.mxu0 0
        %351 = vmatpush.bf16.msra.mxu0 0
        %352 = vmatpush.bf16.msra.mxu0 0
        %353 = vmatpush.bf16.msra.mxu0 0
        %354 = vmatpush.bf16.msra.mxu0 0
        %355 = vmatpush.bf16.msra.mxu0 0
        %356 = vmatpush.bf16.msra.mxu0 0
        %357 = vmatpush.bf16.msra.mxu0 %v345
        %358 = vmatmul.bf16.gmra.mxu0 %v338
        %v359 = vpop.f32.mrf.mxu0
        %v360 = vadd.f32 0.0, %v359
        %v361 = vpop.f32.mrf.mxu0
        %v362 = vadd.f32 0.0, %v361
        %363 = vmatmul.bf16.gmra.mxu0 %v341
        %v364 = vpop.f32.mrf.mxu0
        %v365 = vadd.f32 0.0, %v364
        %v366 = vpop.f32.mrf.mxu0
        %v367 = vadd.f32 0.0, %v366
        %368 = vdwg.mxu0
        %369 = vmatpush.bf16.msra.mxu0 0
        %370 = vmatpush.bf16.msra.mxu0 0
        %371 = vmatpush.bf16.msra.mxu0 0
        %372 = vmatpush.bf16.msra.mxu0 0
        %373 = vmatpush.bf16.msra.mxu0 0
        %374 = vmatpush.bf16.msra.mxu0 0
        %375 = vmatpush.bf16.msra.mxu0 0
        %376 = vmatpush.bf16.msra.mxu0 %v348
        %377 = vmatmul.bf16.gmra.mxu0 %v338
        %v378 = vpop.f32.mrf.mxu0
        %v379 = vadd.f32 0.0, %v378
        %v380 = vpop.f32.mrf.mxu0
        %v381 = vadd.f32 0.0, %v380
        %382 = vmatmul.bf16.gmra.mxu0 %v341
        %v383 = vpop.f32.mrf.mxu0
        %v384 = vadd.f32 0.0, %v383
        %v385 = vpop.f32.mrf.mxu0
        %v386 = vadd.f32 0.0, %v385
        %387 = vdwg.mxu0
        %v388 = vld [vmem:[%s2] sm:$0xff]
        %v389 = vld [vmem:[%s2 + $0x8] sm:$0xff]
        %v390 = vld [vmem:[%s2 + $0x10] sm:$0xff]
        %v391 = vld [vmem:[%s2 + $0x18] sm:$0xff]
        %393 = vset.pattern.permute.xlu0 0
        %394 = vperm.xlu0 %393, %v388
        %v395 = vpop.permute.xlu0 %394
        %398 = vset.pattern.permute.xlu0 0
        %399 = vperm.xlu0 %398, %v389
        %v400 = vpop.permute.xlu0 %399
        %403 = vset.pattern.permute.xlu0 0
        %404 = vperm.xlu0 %403, %v390
        %v405 = vpop.permute.xlu0 %404
        %408 = vset.pattern.permute.xlu0 0
        %409 = vperm.xlu0 %408, %v391
        %v410 = vpop.permute.xlu0 %409
        %v412 = vmul.f32 %v360, %v395
        %v413 = vmul.f32 %v379, %v395
        %v414 = vmul.f32 %v362, %v400
        %v415 = vmul.f32 %v381, %v400
        %v416 = vmul.f32 %v365, %v405
        %v417 = vmul.f32 %v384, %v405
        %v418 = vmul.f32 %v367, %v410
        %v419 = vmul.f32 %v386, %v410
        %v420 = vld [vmem:[%s3] sm:$0xff]
        %v421 = vld [vmem:[%s3 + $0x8] sm:$0xff]
        %v422 = vld [vmem:[%s3 + $0x10] sm:$0xff]
        %v423 = vld [vmem:[%s3 + $0x18] sm:$0xff]
        %425 = vset.pattern.permute.xlu0 0
        %426 = vperm.xlu0 %425, %v420
        %v427 = vpop.permute.xlu0 %426
        %430 = vset.pattern.permute.xlu0 0
        %431 = vperm.xlu0 %430, %v421
        %v432 = vpop.permute.xlu0 %431
        %435 = vset.pattern.permute.xlu0 0
        %436 = vperm.xlu0 %435, %v422
        %v437 = vpop.permute.xlu0 %436
        %440 = vset.pattern.permute.xlu0 0
        %441 = vperm.xlu0 %440, %v423
        %v442 = vpop.permute.xlu0 %441
        %v444 = vadd.f32 %v412, %v427
        %v445 = vadd.f32 %v413, %v427
        %v446 = vadd.f32 %v414, %v432
        %v447 = vadd.f32 %v415, %v432
        %v448 = vadd.f32 %v416, %v437
        %v449 = vadd.f32 %v417, %v437
        %v450 = vadd.f32 %v418, %v442
        %v451 = vadd.f32 %v419, %v442
        %v452 = vmax.f32 %v444, 0.0
        %v453 = vmax.f32 %v445, 0.0
        %v454 = vmax.f32 %v446, 0.0
        %v455 = vmax.f32 %v447, 0.0
        %v456 = vmax.f32 %v448, 0.0
        %v457 = vmax.f32 %v449, 0.0
        %v458 = vmax.f32 %v450, 0.0
        %v459 = vmax.f32 %v451, 0.0
        %v460 = vmin.f32 %v452, 4.0
        %v461 = vmin.f32 %v453, 4.0
        %v462 = vmin.f32 %v454, 4.0
        %v463 = vmin.f32 %v455, 4.0
        %v464 = vmin.f32 %v456, 4.0
        %v465 = vmin.f32 %v457, 4.0
        %v466 = vmin.f32 %v458, 4.0
        %v467 = vmin.f32 %v459, 4.0
        %v468 = vround.ne.pseudo %v460
        %v469 = vround.ne.pseudo %v461
        %v470 = vround.ne.pseudo %v462
        %v471 = vround.ne.pseudo %v463
        %v472 = vround.ne.pseudo %v464
        %v473 = vround.ne.pseudo %v465
        %v474 = vround.ne.pseudo %v466
        %v475 = vround.ne.pseudo %v467
        %v476 = vmul.f32 %v468, 0.25
        %v477 = vmul.f32 %v469, 0.25
        %v478 = vmul.f32 %v470, 0.25
        %v479 = vmul.f32 %v471, 0.25
        %v480 = vmul.f32 %v472, 0.25
        %v481 = vmul.f32 %v473, 0.25
        %v482 = vmul.f32 %v474, 0.25
        %v483 = vmul.f32 %v475, 0.25
        %v484 = vpack.c.bf16 %v478, %v476
        %v485 = vpack.c.bf16 %v479, %v477
        %v486 = vpack.c.bf16 %v482, %v480
        %v487 = vpack.c.bf16 %v483, %v481
        %v488 = vld [vmem:[%s4] sm:$0x3]
        %vm489 = vcmask 261120
        %v491 = vsel %vm489, %v488, 0
        %493 = vmatpush.bf16.msra.mxu0 0
        %494 = vmatpush.bf16.msra.mxu0 0
        %495 = vmatpush.bf16.msra.mxu0 0
        %496 = vmatpush.bf16.msra.mxu0 0
        %497 = vmatpush.bf16.msra.mxu0 0
        %498 = vmatpush.bf16.msra.mxu0 0
        %499 = vmatpush.bf16.msra.mxu0 %v486
        %500 = vmatpush.bf16.msra.mxu0 %v484
        %501 = vmatmul.bf16.gmra.mxu0 %v491
        %v502 = vpop.f32.mrf.mxu0
        %v503 = vadd.f32 0.0, %v502
        %v504 = vpop.f32.mrf.mxu0
        %505 = vdwg.mxu0
        %506 = vmatpush.bf16.msra.mxu0 0
        %507 = vmatpush.bf16.msra.mxu0 0
        %508 = vmatpush.bf16.msra.mxu0 0
        %509 = vmatpush.bf16.msra.mxu0 0
        %510 = vmatpush.bf16.msra.mxu0 0
        %511 = vmatpush.bf16.msra.mxu0 0
        %512 = vmatpush.bf16.msra.mxu0 %v487
        %513 = vmatpush.bf16.msra.mxu0 %v485
        %514 = vmatmul.bf16.gmra.mxu0 %v491
        %v515 = vpop.f32.mrf.mxu0
        %v516 = vadd.f32 0.0, %v515
        %v517 = vpop.f32.mrf.mxu0
        %518 = vdwg.mxu0
        %v519 = vld [vmem:[%s5] sm:$0xf]
        %521 = vset.pattern.permute.xlu0 0
        %522 = vperm.xlu0 %521, %v519
        %v523 = vpop.permute.xlu0 %522
        %v525 = vmul.f32 %v503, %v523
        %v526 = vmul.f32 %v516, %v523
        %v527 = vld [vmem:[%s6] sm:$0xf]
        %529 = vset.pattern.permute.xlu0 0
        %530 = vperm.xlu0 %529, %v527
        %v531 = vpop.permute.xlu0 %530
        %v533 = vadd.f32 %v525, %v531
        %v534 = vadd.f32 %v526, %v531
        %v537 = vrot.slane %v534, 4
        %vm538 = vcmask 1043456
        %v539 = vsel %vm538, %v533, %v537
        %541 = vst [vmem:[%s296] sm:$0xff] %v539
        %s542 = sand.u32 %s197, 1
        %s543 = scalar_lea.sflag [#allocation3], %s542
        %s544 = sand.u32 %s197, 1
        %s545 = smul.addr %s544, 8
        %s546 = scalar_lea.vmem [#allocation2], %s545
        // Predicated region
        $region49: #{tpu_custom_call.1} parent=47 // pred_check
          %p547 = pneg %p207
        $region50: #{tpu_custom_call.1} parent=47 // pred_check_branch
          %549 = sbr.rel (%p547) target = $region52
        $region51: #{tpu_custom_call.1} parent=47 // pred_region
          %s550 = smul.u32 2, %s26
          %552 = vsyncadd %s543, 0
          %s553 = smul.addr %s25, 2
          %s554 = sadd.s32 %s550, %s553
          %s555 = smul.addr %s554, 4
          %s556 = scalar_lea.hbm %s7, %s555
          %s558 = sshll.u32 %s546, 4
          %s559 = int_to_ptr.vmem [resolvable:$true] %s558
          %s560 = sshll.u32 %s556, 4
          %s561 = int_to_ptr.hbm [resolvable:$true] %s560
          %563 = dma.vmem_to_hbm [thread:$0]  %s559, 128, %s561, %s543
        $region52: #{tpu_custom_call.1} parent=47 // pred_fallthru
          _
      $region48: #{tpu_custom_call.1} parent=5 // pred_fallthru
        _
      %p564 = scmp.le.s32.totalorder 2, %s16
      // Predicated region
      $region53: #{tpu_custom_call.1} parent=5 // pred_check
        %p565 = pneg %p564
      $region54: #{tpu_custom_call.1} parent=5 // pred_check_branch
        %567 = sbr.rel (%p565) target = $region56
      $region55: #{tpu_custom_call.1} parent=5 // pred_region
        %s568 = ssub.s32 %s16, 2
        // Predicated region
        $region57: #{tpu_custom_call.1} parent=55 // pred_check
          %p569 = pneg %p213
        $region58: #{tpu_custom_call.1} parent=55 // pred_check_branch
          %571 = sbr.rel (%p569) target = $region60
        $region59: #{tpu_custom_call.1} parent=55 // pred_region
          %s572 = sand.u32 %s198, 1
          %s573 = scalar_lea.sflag [#allocation3], %s572
          %s574 = sand.u32 %s198, 1
          %s575 = smul.addr %s574, 8
          %s576 = scalar_lea.vmem [#allocation2], %s575
          %578 = dma.done %s573, 128
        $region60: #{tpu_custom_call.1} parent=55 // pred_fallthru
          _
      $region56: #{tpu_custom_call.1} parent=5 // pred_fallthru
        _
    $region6: #{tpu_custom_call.1} parent=1 // loop_footer
      %s20 = sadd.s32 1, %s16
    $region7: #{tpu_custom_call.1} parent=1 // loop_footer_branch
      %15 = sbr.rel target = $region3
    $region8: #{tpu_custom_call.1} parent=1 // loop_exit
      _
    %579 = vsyncpa [#allocation3], 1
    %s580 = scalar_lea.sflag [#allocation3], 1
    %581 = vsyncpa %s580, 1

</llo_original>
